<compile_context>
chip_gen: v6e
topology: v6e:2x2x1
jax: 0.10.0
libtpu: 0.0.40
codegen_flags: <defaults>
</compile_context>

<pallas_src>
import functools

import jax
import jax.numpy as jnp
from jax.experimental import pallas as pl
from jax.experimental.pallas import tpu as pltpu

EPS = 0.3  # matches LabelSmoothingCrossEntropy1(eps=0.3, reduction='mean')


def _ls_ce_tile_kernel(logits_ref, target_ref, partial_ref, *, eps):
    """Per row-tile: emit row_loss_i = lse_i - sum_j w_ij * x_ij, shape (TILE_N, 1) f32."""
    x = logits_ref[...].astype(jnp.float32)   # (TILE_N, C); no-op cast for f32 inputs
    tgt = target_ref[...]                     # (TILE_N, 1) int32
    tn, c = x.shape

    # numerically stable log-sum-exp along the class (lane) axis
    m = jnp.max(x, axis=-1, keepdims=True)                                # (TILE_N, 1)
    lse = m + jnp.log(jnp.sum(jnp.exp(x - m), axis=-1, keepdims=True))    # (TILE_N, 1)

    # fused weighted reduction:  sum(w*x) = eps/C * sum(x) + (1-eps) * x[target]
    col = jax.lax.broadcasted_iota(jnp.int32, (tn, c), 1)
    base = jnp.float32(eps / c)
    w = jnp.where(col == tgt, base + jnp.float32(1.0 - eps), base)
    partial_ref[...] = lse - jnp.sum(w * x, axis=-1, keepdims=True)


def _vmem_capacity_bytes():
    try:
        return int(pltpu.get_tpu_info().vmem_capacity_bytes)
    except Exception:
        return 64 * 1024 * 1024  # conservative (v7x-sized) fallback


def _choose_tile_n(n, c, itemsize, tile_budget_bytes):
    """Largest sublane-aligned row tile whose single logits buffer fits the budget,
    while keeping at least 2 grid steps when possible (v7x megacore)."""
    align = 8 * max(1, 4 // max(1, itemsize))   # 8 f32, 16 bf16, 32 int8/fp8
    per_row = max(1, c * itemsize)
    tn = tile_budget_bytes // per_row
    tn = (tn // align) * align
    tn = max(align, tn)
    if tn >= n:
        # Split a single-tile-sized batch in two so dimension_semantics=("parallel",)
        # can use both TensorCores on v7x; costs nothing on v5e/v6e.
        half = -(-n // 2)
        half = -(-half // align) * align
        if align <= half < n:
            return half
        return n
    return tn


def label_smoothing_ce(logits, target, eps=EPS, tile_n=None):
    """logits: (N, C) float, target: (N,) int. Returns scalar float32 loss (mean)."""
    n, c = logits.shape
    itemsize = logits.dtype.itemsize
    target2d = target.astype(jnp.int32).reshape(n, 1)

    cap = _vmem_capacity_bytes()
    # Per-buffer logits tile budget; leaves headroom for double buffering,
    # the f32 upcast and exp intermediates, and the (TILE_N, 1) output.
    tile_budget = max(512 * 1024, min(cap // 8, 16 * 1024 * 1024))
    vmem_limit = int(min(cap * 3 // 4, 96 * 1024 * 1024))

    align = 8 * max(1, 4 // max(1, itemsize))
    if tile_n is None:
        tile_n = _choose_tile_n(n, c, itemsize, tile_budget)
    else:
        tile_n = min(int(tile_n), n)
        if tile_n < n:
            tile_n = max(align, (tile_n // align) * align)  # keep (8,128) block rule

    grid = (pl.cdiv(n, tile_n),)
    row_spec = pl.BlockSpec((tile_n, 1), lambda i: (i, 0))

    cost = pl.CostEstimate(
        flops=7 * n * c,
        transcendentals=n * c,
        bytes_accessed=n * c * itemsize + n * 4 + n * 4,
    )

    per_row = pl.pallas_call(
        functools.partial(_ls_ce_tile_kernel, eps=float(eps)),
        out_shape=jax.ShapeDtypeStruct((n, 1), jnp.float32),
        grid_spec=pltpu.PrefetchScalarGridSpec(
            num_scalar_prefetch=0,
            grid=grid,
            in_specs=[
                pl.BlockSpec((tile_n, c), lambda i: (i, 0)),
                pl.BlockSpec((tile_n, 1), lambda i: (i, 0)),
            ],
            out_specs=row_spec,
        ),
        compiler_params=pltpu.CompilerParams(
            dimension_semantics=("parallel",),
            vmem_limit_bytes=vmem_limit,
        ),
        cost_estimate=cost,
    )(logits, target2d)

    # Tiny final combine: mean over rows of the fused per-row partial.
    return jnp.sum(per_row) / n


def _reference(logits, target, eps=EPS):
    # Pure-JAX reference mirroring the PyTorch forward.
    c = logits.shape[-1]
    logp = jax.nn.log_softmax(logits.astype(jnp.float32), axis=-1)
    loss = jnp.mean(-jnp.sum(logp, axis=-1))
    nll = jnp.mean(-jnp.take_along_axis(logp, target[:, None], axis=-1)[:, 0])
    return loss * eps / c + (1.0 - eps) * nll


if __name__ == "__main__":
    key = jax.random.PRNGKey(0)
    k_logits, k_tgt = jax.random.split(key)
    N, C = 32, 64
    logits = jax.random.normal(k_logits, (N, C), dtype=jnp.float32)
    target = jax.random.randint(k_tgt, (N,), 0, C, dtype=jnp.int32)

    # Multi-tile path: 4 row tiles on the parallel grid.
    out_tiled = label_smoothing_ce(logits, target, tile_n=8)
    # Auto-sized path (splits into >=2 tiles for megacore even on tiny inputs).
    out_auto = label_smoothing_ce(logits, target)
    jax.block_until_ready((out_tiled, out_auto))

    ref = _reference(logits, target)
    assert jnp.allclose(out_tiled, ref, atol=1e-5, rtol=1e-5), (out_tiled, ref)
    assert jnp.allclose(out_auto, ref, atol=1e-5, rtol=1e-5), (out_auto, ref)
    print("KERNEL_OK")
</pallas_src>

<mosaic_0001>
module attributes {stable_mosaic.version = 11 : i64} {
  func.func @_ls_ce_tile_kernel(%arg0: i32, %arg1: memref<8x64xf32, #tpu.memory_space<vmem>>, %arg2: memref<8x1xi32, #tpu.memory_space<vmem>>, %arg3: memref<8x1xf32, #tpu.memory_space<vmem>>) attributes {dimension_semantics = [#tpu.dimension_semantics<parallel>], iteration_bounds = array<i64: 4>, scalar_prefetch = 0 : i64, scratch_operands = 0 : i64, tpu.core_type = #tpu.core_type<tc>, window_params = [{transform_indices = @transform_0, window_bounds = array<i64: 8, 64>}, {transform_indices = @transform_1, window_bounds = array<i64: 8, 1>}, {transform_indices = @transform_2, window_bounds = array<i64: 8, 1>}]} {
    %c0 = arith.constant 0 : index
    %c0_0 = arith.constant 0 : index
    %0 = vector.load %arg1[%c0, %c0_0] : memref<8x64xf32, #tpu.memory_space<vmem>>, vector<8x64xf32>
    %c0_1 = arith.constant 0 : index
    %c0_2 = arith.constant 0 : index
    %1 = vector.load %arg2[%c0_1, %c0_2] : memref<8x1xi32, #tpu.memory_space<vmem>>, vector<8x1xi32>
    %cst = arith.constant dense<0xFF800000> : vector<8xf32>
    %2 = vector.multi_reduction <maximumf>, %0, %cst [1] : vector<8x64xf32> to vector<8xf32>
    %3 = vector.shape_cast %2 : vector<8xf32> to vector<8x1xf32>
    %4 = vector.broadcast %3 : vector<8x1xf32> to vector<8x64xf32>
    %5 = arith.subf %0, %4 : vector<8x64xf32>
    %6 = math.exp %5 : vector<8x64xf32>
    %cst_3 = arith.constant dense<0.000000e+00> : vector<8xf32>
    %7 = vector.multi_reduction <add>, %6, %cst_3 [1] : vector<8x64xf32> to vector<8xf32>
    %8 = vector.shape_cast %7 : vector<8xf32> to vector<8x1xf32>
    %9 = math.log %8 : vector<8x1xf32>
    %10 = arith.addf %3, %9 : vector<8x1xf32>
    %11 = tpu.iota {dimensions = array<i32: 1>} : vector<8x64xi32>
    %12 = vector.broadcast %1 : vector<8x1xi32> to vector<8x64xi32>
    %13 = arith.cmpi eq, %11, %12 : vector<8x64xi32>
    %cst_4 = arith.constant 4.687500e-03 : f32
    %cst_5 = arith.constant 0.699999988 : f32
    %14 = arith.addf %cst_4, %cst_5 : f32
    %cst_6 = arith.constant 4.687500e-03 : f32
    %15 = vector.broadcast %14 : f32 to vector<8x64xf32>
    %16 = vector.broadcast %cst_6 : f32 to vector<8x64xf32>
    %17 = arith.select %13, %15, %16 : vector<8x64xi1>, vector<8x64xf32>
    %18 = arith.mulf %17, %0 : vector<8x64xf32>
    %cst_7 = arith.constant dense<0.000000e+00> : vector<8xf32>
    %19 = vector.multi_reduction <add>, %18, %cst_7 [1] : vector<8x64xf32> to vector<8xf32>
    %20 = vector.shape_cast %19 : vector<8xf32> to vector<8x1xf32>
    %21 = arith.subf %10, %20 : vector<8x1xf32>
    %c0_8 = arith.constant 0 : index
    %c0_9 = arith.constant 0 : index
    %22 = vector.load %arg3[%c0_8, %c0_9] : memref<8x1xf32, #tpu.memory_space<vmem>>, vector<8x1xf32>
    tpu.vector_store %arg3[%c0_8, %c0_9], %21 {strides = array<i32>} : memref<8x1xf32, #tpu.memory_space<vmem>>, vector<8x1xf32>,
    return
  }
  func.func @transform_0(%arg0: i32) -> (i32, i32) {
    %c0_i32 = arith.constant 0 : i32
    %c0_i32_0 = arith.constant 0 : i32
    return %arg0, %c0_i32 : i32, i32
  }
  func.func @transform_1(%arg0: i32) -> (i32, i32) {
    %c0_i32 = arith.constant 0 : i32
    %c0_i32_0 = arith.constant 0 : i32
    return %arg0, %c0_i32 : i32, i32
  }
  func.func @transform_2(%arg0: i32) -> (i32, i32) {
    %c0_i32 = arith.constant 0 : i32
    %c0_i32_0 = arith.constant 0 : i32
    return %arg0, %c0_i32 : i32, i32
  }
}

</mosaic_0001>

<llo_original>
// kernel: tpu_custom_call.1
$region0: #{tpu_custom_call.1}
  #allocation0 [shape = 'u32[]', space=smem, size = 0x4, offset = 0x4, fixed_abs, tag = 'smem constant byte address 0x4 - core index']
  #allocation1 [shape = 'u32[144,128]{1,0:T(1,128)}', space=vmem, size = 0x12000, scoped, tag = 'internal scratch']
  %s0 = inlined_call_operand.vmem [shape: f32[32,64], index: 0, kind: input, shape index: {}]
  %s1 = inlined_call_operand.vmem [shape: s32[32,1], index: 1, kind: input, shape index: {}]
  %s2 = inlined_call_operand.vmem [shape: f32[32,1], index: 2, kind: output, shape index: {}]
  %s3 = sld [smem:[#allocation0]]
  $region41: #{tpu_custom_call.1} parent=0
    _
  %s5 = ssub.s32 1, %s3
  %s6 = scalar_select 0, %s5, %s3
  loop: start=0, step=1, limit=6
  $region2: #{tpu_custom_call.1} parent=0 // loop_pre_header
    _
  $region3: #{tpu_custom_call.1} parent=0 // loop_header
    %s8 = sphi 0, %s12
    %p9 = scmp.ge.s32.totalorder %s8, 6
    %s18 = sphi 0, %s20
    %s21 = sphi 0, %s18
    %s22 = sphi 0, %s21
    %s38 = sphi 0, %s22
    %s44 = sphi 0, %s46
    %s47 = sphi 0, %s44
    %s48 = sphi 0, %s47
    %s64 = sphi 0, %s48
    %s70 = sphi 0, %s72
    %s73 = sphi 0, %s70
    %s74 = sphi 0, %s73
    %s90 = sphi 0, %s74
  $region4: #{tpu_custom_call.1} parent=0 // loop_header_branch
    %11 = sbr.rel (%p9) target = $region8
  $region5: #{tpu_custom_call.1} parent=0 // loop_body
    %s13 = ssub.s32 %s8, 1
    %s14 = ssub.s32 %s8, 2
    %s15 = sadd.s32 %s8, 1
    %s16 = ssub.s32 %s8, %s15
    %p17 = scmp.eq.s32.totalorder %s16, 0
    %s19 = sadd.s32 %s18, 1
    %s20 = scalar_select %p17, %s18, %s19
    %p23 = pneg %p17
    %p24 = scmp.eq.s32.totalorder %s8, 3
    %p25 = por %p23, %p24
    %p26 = scmp.ne.s32.totalorder %s18, %s21
    %p27 = scmp.eq.s32.totalorder %s8, 0
    %p28 = por %p26, %p27
    %p29 = scmp.ne.s32.totalorder %s18, %s21
    %p30 = scmp.eq.s32.totalorder %s13, 3
    %p31 = por %p29, %p30
    %p32 = scmp.ne.s32.totalorder %s21, %s22
    %p33 = scmp.eq.s32.totalorder %s13, 0
    %p34 = por %p32, %p33
    %p35 = scmp.ne.s32.totalorder %s21, %s22
    %p36 = scmp.eq.s32.totalorder %s14, 3
    %p37 = por %p35, %p36
    %p39 = scmp.ne.s32.totalorder %s22, %s38
    %p40 = scmp.eq.s32.totalorder %s14, 0
    %p41 = por %p39, %p40
    %s42 = ssub.s32 %s8, %s15
    %p43 = scmp.eq.s32.totalorder %s42, 0
    %s45 = sadd.s32 %s44, 1
    %s46 = scalar_select %p43, %s44, %s45
    %p49 = pneg %p43
    %p50 = scmp.eq.s32.totalorder %s8, 3
    %p51 = por %p49, %p50
    %p52 = scmp.ne.s32.totalorder %s44, %s47
    %p53 = scmp.eq.s32.totalorder %s8, 0
    %p54 = por %p52, %p53
    %p55 = scmp.ne.s32.totalorder %s44, %s47
    %p56 = scmp.eq.s32.totalorder %s13, 3
    %p57 = por %p55, %p56
    %p58 = scmp.ne.s32.totalorder %s47, %s48
    %p59 = scmp.eq.s32.totalorder %s13, 0
    %p60 = por %p58, %p59
    %p61 = scmp.ne.s32.totalorder %s47, %s48
    %p62 = scmp.eq.s32.totalorder %s14, 3
    %p63 = por %p61, %p62
    %p65 = scmp.ne.s32.totalorder %s48, %s64
    %p66 = scmp.eq.s32.totalorder %s14, 0
    %p67 = por %p65, %p66
    %s68 = ssub.s32 %s8, %s15
    %p69 = scmp.eq.s32.totalorder %s68, 0
    %s71 = sadd.s32 %s70, 1
    %s72 = scalar_select %p69, %s70, %s71
    %p75 = pneg %p69
    %p76 = scmp.eq.s32.totalorder %s8, 3
    %p77 = por %p75, %p76
    %p78 = scmp.ne.s32.totalorder %s70, %s73
    %p79 = scmp.eq.s32.totalorder %s8, 0
    %p80 = por %p78, %p79
    %p81 = scmp.ne.s32.totalorder %s70, %s73
    %p82 = scmp.eq.s32.totalorder %s13, 3
    %p83 = por %p81, %p82
    %p84 = scmp.ne.s32.totalorder %s73, %s74
    %p85 = scmp.eq.s32.totalorder %s13, 0
    %p86 = por %p84, %p85
    %p87 = scmp.ne.s32.totalorder %s73, %s74
    %p88 = scmp.eq.s32.totalorder %s14, 3
    %p89 = por %p87, %p88
    %p91 = scmp.ne.s32.totalorder %s74, %s90
    %p92 = scmp.eq.s32.totalorder %s14, 0
    %p93 = por %p91, %p92
    %p94 = scmp.le.s32.totalorder 1, %s8
    %p95 = scmp.lt.s32.totalorder %s8, 5
    %p96 = pnand %p94, %p95
    %p97 = pneg %p96
    // Predicated region
    $region9: #{tpu_custom_call.1} parent=5 // pred_check
      _
    $region10: #{tpu_custom_call.1} parent=5 // pred_check_branch
      %99 = sbr.rel (%p96) target = $region12
    $region11: #{tpu_custom_call.1} parent=5 // pred_region
      %s100 = ssub.s32 %s8, 1
    $region12: #{tpu_custom_call.1} parent=5 // pred_fallthru
      _
    %p101 = scmp.lt.s32.totalorder %s8, 4
    // Predicated region
    $region13: #{tpu_custom_call.1} parent=5 // pred_check
      %p102 = pneg %p101
    $region14: #{tpu_custom_call.1} parent=5 // pred_check_branch
      %104 = sbr.rel (%p102) target = $region16
    $region15: #{tpu_custom_call.1} parent=5 // pred_region
      // Predicated region
      $region17: #{tpu_custom_call.1} parent=15 // pred_check
        %p105 = pneg %p28
      $region18: #{tpu_custom_call.1} parent=15 // pred_check_branch
        %107 = sbr.rel (%p105) target = $region20
      $region19: #{tpu_custom_call.1} parent=15 // pred_region
        %p108 = scmp.lt.s32.totalorder %s8, 3
        %s109 = scalar_select %p108, %s8, 3
        %s110 = smul.addr %s109, 8
        %s111 = scalar_lea.vmem %s0, %s110
      $region20: #{tpu_custom_call.1} parent=15 // pred_fallthru
        _
      // Predicated region
      $region21: #{tpu_custom_call.1} parent=15 // pred_check
        %p112 = pneg %p54
      $region22: #{tpu_custom_call.1} parent=15 // pred_check_branch
        %114 = sbr.rel (%p112) target = $region24
      $region23: #{tpu_custom_call.1} parent=15 // pred_region
        %p115 = scmp.lt.s32.totalorder %s8, 3
        %s116 = scalar_select %p115, %s8, 3
        %s117 = smul.addr %s116, 8
        %s118 = scalar_lea.vmem %s1, %s117
      $region24: #{tpu_custom_call.1} parent=15 // pred_fallthru
        _
    $region16: #{tpu_custom_call.1} parent=5 // pred_fallthru
      _
    %p119 = scmp.le.s32.totalorder 1, %s8
    %p120 = scmp.lt.s32.totalorder %s8, 5
    %p121 = pnand %p119, %p120
    %p122 = pneg %p121
    // Predicated region
    $region25: #{tpu_custom_call.1} parent=5 // pred_check
      _
    $region26: #{tpu_custom_call.1} parent=5 // pred_check_branch
      %124 = sbr.rel (%p121) target = $region28
    $region27: #{tpu_custom_call.1} parent=5 // pred_region
      %s125 = ssub.s32 %s8, 1
      %p126 = scmp.lt.s32.totalorder %s13, 3
      %s127 = scalar_select %p126, %s13, 3
      %s128 = smul.addr %s127, 8
      %s129 = scalar_lea.vmem %s0, %s128
      %p130 = pneg %p34
      %p131 = pneg %p31
      %p132 = scmp.lt.s32.totalorder %s13, 3
      %s133 = scalar_select %p132, %s13, 3
      %s134 = smul.addr %s133, 8
      %s135 = scalar_lea.vmem %s1, %s134
      %p136 = pneg %p60
      %p137 = pneg %p57
      %p138 = pneg %p86
      %p139 = pneg %p83
      %p140 = scmp.lt.s32.totalorder %s13, 3
      %s141 = scalar_select %p140, %s13, 3
      %s142 = smul.addr %s141, 8
      %s143 = scalar_lea.vmem %s2, %s142
      %p144 = scmp.lt.s32.totalorder %s13, 3
      %s145 = scalar_select %p144, %s13, 3
      %s146 = smul.addr %s145, 8
      %s147 = scalar_lea.vmem %s0, %s146
      %p148 = scmp.lt.s32.totalorder %s13, 3
      %s149 = scalar_select %p148, %s13, 3
      %s150 = smul.addr %s149, 8
      %s151 = scalar_lea.vmem %s1, %s150
      %p152 = scmp.lt.s32.totalorder %s13, 3
      %s153 = scalar_select %p152, %s13, 3
      %s154 = smul.addr %s153, 8
      %s155 = scalar_lea.vmem %s2, %s154
      %v156 = vld [vmem:[%s147] sm:$0xff]
      %v157 = vld [vmem:[%s151] sm:$0xff]
      %vm158 = vcmask 523264
      %v159 = vsel %vm158, %v156, -inf
      %160 = vmax.xlane.f32.xlu0 %v159
      %v161 = vpop.xlane.xlu0 %160
      %v162 = vsub.f32 %v156, %v161
      %v163 = vmul.f32 %v162, 1.442695
      %v164 = vpow.pop %v163
      %v165 = vsel %vm158, %v164, 0.0
      %166 = vadd.xlane.f32.xlu0 %v165
      %v167 = vpop.xlane.xlu0 %166
      %v168 = vlog2.pop %v167
      %v169 = vmul.f32 %v168, 0.6931472
      %v170 = vadd.f32 %v161, %v169
      %v171 = vlaneseq
      %v172 = vand.u32 %v171, 127
      %173 = vset.pattern.permute.xlu0 0
      %174 = vperm.xlu0 %173, %v157
      %v175 = vpop.permute.xlu0 %174
      %vm176 = vcmp.eq.s32.totalorder %v172, %v175
      %v177 = vsel %vm176, 0.7046875, 0.0046875
      %v178 = vmul.f32 %v177, %v156
      %v179 = vsel %vm158, %v178, 0.0
      %180 = vadd.xlane.f32.xlu0 %v179
      %v181 = vpop.xlane.xlu0 %180
      %v182 = vsub.f32 %v170, %v181
      %vm183 = vcmask 7168
      %184 = vst.msk [vmem:[%s155] sm:$0xff] %vm183, %v182
      %p185 = scmp.lt.s32.totalorder %s13, 3
      %s186 = scalar_select %p185, %s13, 3
      %s187 = smul.addr %s186, 8
      %s188 = scalar_lea.vmem %s2, %s187
      // Predicated region
      $region29: #{tpu_custom_call.1} parent=27 // pred_check
        %p189 = pneg %p83
      $region30: #{tpu_custom_call.1} parent=27 // pred_check_branch
        %191 = sbr.rel (%p189) target = $region32
      $region31: #{tpu_custom_call.1} parent=27 // pred_region
        _
      $region32: #{tpu_custom_call.1} parent=27 // pred_fallthru
        _
    $region28: #{tpu_custom_call.1} parent=5 // pred_fallthru
      _
    %p192 = scmp.le.s32.totalorder 2, %s8
    // Predicated region
    $region33: #{tpu_custom_call.1} parent=5 // pred_check
      %p193 = pneg %p192
    $region34: #{tpu_custom_call.1} parent=5 // pred_check_branch
      %195 = sbr.rel (%p193) target = $region36
    $region35: #{tpu_custom_call.1} parent=5 // pred_region
      %s196 = ssub.s32 %s8, 2
      // Predicated region
      $region37: #{tpu_custom_call.1} parent=35 // pred_check
        %p197 = pneg %p89
      $region38: #{tpu_custom_call.1} parent=35 // pred_check_branch
        %199 = sbr.rel (%p197) target = $region40
      $region39: #{tpu_custom_call.1} parent=35 // pred_region
        %p200 = scmp.lt.s32.totalorder %s14, 3
        %s201 = scalar_select %p200, %s14, 3
        %s202 = smul.addr %s201, 8
        %s203 = scalar_lea.vmem %s2, %s202
      $region40: #{tpu_custom_call.1} parent=35 // pred_fallthru
        _
    $region36: #{tpu_custom_call.1} parent=5 // pred_fallthru
      _
  $region6: #{tpu_custom_call.1} parent=0 // loop_footer
    %s12 = sadd.s32 1, %s8
  $region7: #{tpu_custom_call.1} parent=0 // loop_footer_branch
    %7 = sbr.rel target = $region3
  $region8: #{tpu_custom_call.1} parent=0 // loop_exit
    _

</llo_original>
